<compile_context>
chip_gen: v5e
topology: v5e:2x2
jax: 0.10.0
libtpu: 0.0.40
codegen_flags: <defaults>
</compile_context>

<pallas_src>
import functools
import math

import jax
import jax.numpy as jnp
from jax.experimental import pallas as pl
from jax.experimental.pallas import tpu as pltpu

HIDDEN = 64
NEG_SLOPE = 0.1  # nn.LeakyReLU(negative_slope=0.1)


def _round_up(x, m):
    return ((x + m - 1) // m) * m


def _cdiv(a, b):
    return -(-a // b)


# --------------------------------------------------------------------------------------
# Kernel
# --------------------------------------------------------------------------------------
def lane_wise_cross_attention_kernel(x_ref, w1_ref, b1_ref, w2_ref, b2_ref, o_ref,
                                     *, approx_recip=False):
    """Fused encoder + cross attention.

    x_ref : (TM, Kpad)   [lane | veh | light | ego | small zero pad]
    w1_ref: (Kpad, 256)  block-diagonal packing of the 4 input encoders
    w2_ref: (256, 256)   cols 0..191 = blockdiag(w,w,w); cols 192..194 = fused score weights
    o_ref : (TM, 128)    lane-dense output, real data in cols 0..63
    """
    h = HIDDEN
    x = x_ref[...]

    # (1) all four branch encoders in a single MXU pass, then ReLU (VPU, f32).
    hidden = jnp.dot(x, w1_ref[...], preferred_element_type=jnp.float32) + b1_ref[...]
    hidden = jnp.maximum(hidden, 0.0)                       # (TM, 256) = [lane|veh|light|ego]

    # (2) single fused N=256 MXU pass: branch encodings AND attention logits together.
    enc2 = jnp.dot(hidden.astype(w2_ref.dtype), w2_ref[...],
                   preferred_element_type=jnp.float32) + b2_ref[...]   # (TM, 256)

    # attention logits -> LeakyReLU(0.1) -> stable softmax over the 3 branches.
    s = enc2[:, 3 * h:3 * h + 3]                            # (TM, 3)
    s = jnp.where(s >= 0, s, NEG_SLOPE * s)
    s = s - jnp.max(s, axis=-1, keepdims=True)
    e = jnp.exp(s)
    denom = jnp.sum(e, axis=-1, keepdims=True)
    if approx_recip:
        p = e * pl.reciprocal(denom, approx=True)           # EUP slot, effectively free
    else:
        p = e / denom                                       # exact path for tight f32 check

    # weighted sum of the three 64-wide encodings.
    out64 = (p[:, 0:1] * enc2[:, 0:h]
             + p[:, 1:2] * enc2[:, h:2 * h]
             + p[:, 2:3] * enc2[:, 2 * h:3 * h])            # (TM, 64)

    # lane-dense 128-wide store (cols 64..127 are zero filler, sliced off in the wrapper).
    o_ref[...] = jnp.concatenate([out64, jnp.zeros_like(out64)], axis=-1).astype(o_ref.dtype)


# --------------------------------------------------------------------------------------
# Parameter fusion (plain JAX, done once per parameter set)
# --------------------------------------------------------------------------------------
def fuse_params(params, dims, hidden=HIDDEN, use_bf16=False):
    """Pack PyTorch-style (out,in) weights into the 2 fused matrices the kernel consumes."""
    wp = dims['waypoints']
    veh_d = dims['companion_vehicle'] * 2
    light_d = dims['light']
    ego_d = dims['ego_vehicle']
    h = hidden
    k_in = wp + veh_d + light_d + ego_d
    k_pad = _round_up(k_in, 8)                   # sublane alignment only -- no 128 pad in HBM

    T = lambda n: params[n + '_w'].T.astype(jnp.float32)    # (in, out)
    b = lambda n: params[n + '_b'].astype(jnp.float32)

    # W1 (Kpad, 4H): block-diagonal packing of the four input encoders.
    w1 = jnp.zeros((k_pad, 4 * h), jnp.float32)
    off = 0
    for g, (name, d) in enumerate([('lane_encoder', wp), ('veh_encoder', veh_d),
                                   ('light_encoder', light_d), ('ego_encoder', ego_d)]):
        w1 = w1.at[off:off + d, g * h:(g + 1) * h].set(T(name))
        off += d
    b1 = jnp.concatenate([b('lane_encoder'), b('veh_encoder'),
                          b('light_encoder'), b('ego_encoder')])[None, :]         # (1, 4H)

    # W2 (4H, 4H): cols 0..3H-1 = blockdiag(w,w,w); cols 3H..3H+2 = fused scores; rest zero.
    w_w, b_w = T('w'), b('w')
    w2 = jnp.zeros((4 * h, 4 * h), jnp.float32)
    for g in range(3):
        w2 = w2.at[g * h:(g + 1) * h, g * h:(g + 1) * h].set(w_w)

    # Algebraic fusion of w -> ego_o and w -> ego_a (pure linear chains).
    w_wo = w_w @ T('ego_o')                      # (H, 1)
    w_wa = w_w @ T('ego_a')                      # (H, 1)
    b_wo = b_w @ T('ego_o') + b('ego_o')         # (1,)
    b_wa = b_w @ T('ego_a') + b('ego_a')         # (1,)
    for g in range(3):
        w2 = w2.at[g * h:(g + 1) * h, 3 * h + g].set(w_wo[:, 0])
    w2 = w2.at[3 * h:4 * h, 3 * h:3 * h + 3].set(jnp.broadcast_to(w_wa, (h, 3)))

    b2 = jnp.zeros((1, 4 * h), jnp.float32)
    b2 = b2.at[0, :3 * h].set(jnp.tile(b_w, 3))
    b2 = b2.at[0, 3 * h:3 * h + 3].set((b_wo + b_wa)[0])

    wdt = jnp.bfloat16 if use_bf16 else jnp.float32         # MXU operand dtype
    return (w1.astype(wdt), b1, w2.astype(wdt), b2)


# --------------------------------------------------------------------------------------
# Wrapper
# --------------------------------------------------------------------------------------
def _pick_tm(batch):
    """Batch tile: multiple of 8 sublanes; >=2 grid steps for medium/large batches so
    dimension_semantics=("parallel",) can use both v7x TensorCores; capped at 1024 so the
    working set (~4 MiB) stays far below v5e's 16 MiB scoped-VMEM default."""
    if batch < 64:
        return _round_up(max(batch, 1), 8)
    return min(1024, _round_up(_cdiv(batch, 2), 8))


def lane_wise_cross_attention_forward(lane_veh, ego_info, fused, *, tm=None):
    w1, b1, w2, b2 = fused
    B = lane_veh.shape[0]
    k_pad = w1.shape[0]
    h4 = w2.shape[1]
    h = h4 // 4
    out_w = 2 * h                                            # 128-lane dense output slab
    x_dt = w1.dtype

    if tm is None:
        tm = _pick_tm(B)
    b_pad = _round_up(B, tm)

    # Natural-width input slab: [lane | veh | light | ego] plus a few alignment columns.
    x = jnp.concatenate([lane_veh, ego_info], axis=1).astype(x_dt)
    x = jnp.pad(x, ((0, b_pad - B), (0, k_pad - x.shape[1])))

    resident = lambda arr: pl.BlockSpec(arr.shape, lambda i: (0, 0))   # weights stay in VMEM

    flops = 2 * b_pad * k_pad * h4 + 2 * b_pad * h4 * h4 + 16 * b_pad * h
    bytes_accessed = (x.size * x.dtype.itemsize
                      + w1.size * w1.dtype.itemsize + w2.size * w2.dtype.itemsize
                      + (b1.size + b2.size) * 4
                      + b_pad * out_w * 4)

    out = pl.pallas_call(
        functools.partial(lane_wise_cross_attention_kernel,
                          approx_recip=(x_dt == jnp.bfloat16)),
        out_shape=jax.ShapeDtypeStruct((b_pad, out_w), jnp.float32),
        grid=(b_pad // tm,),
        in_specs=[
            pl.BlockSpec((tm, k_pad), lambda i: (i, 0)),
            resident(w1), resident(b1), resident(w2), resident(b2),
        ],
        out_specs=pl.BlockSpec((tm, out_w), lambda i: (i, 0)),
        compiler_params=pltpu.CompilerParams(dimension_semantics=("parallel",)),
        cost_estimate=pl.CostEstimate(flops=int(flops),
                                      transcendentals=int(3 * b_pad),
                                      bytes_accessed=int(bytes_accessed)),
    )(x, w1, b1, w2, b2)
    return out[:B, :h]


# --------------------------------------------------------------------------------------
# Deterministic init + pure-JAX reference of the PyTorch forward
# --------------------------------------------------------------------------------------
def init_params(key, dims, hidden=HIDDEN):
    layers = {
        'lane_encoder': (dims['waypoints'], hidden),
        'veh_encoder': (dims['companion_vehicle'] * 2, hidden),
        'light_encoder': (dims['light'], hidden),
        'ego_encoder': (dims['ego_vehicle'], hidden),
        'w': (hidden, hidden),
        'ego_a': (hidden, 1),
        'ego_o': (hidden, 1),
    }
    params = {}
    keys = jax.random.split(key, 2 * len(layers))
    for i, (name, (fin, fout)) in enumerate(layers.items()):
        bound = 1.0 / math.sqrt(fin)
        params[name + '_w'] = jax.random.uniform(keys[2 * i], (fout, fin),
                                                 jnp.float32, -bound, bound)
        params[name + '_b'] = jax.random.uniform(keys[2 * i + 1], (fout,),
                                                 jnp.float32, -bound, bound)
    return params


def reference_forward(lane_veh, ego_info, params, dims, hidden=HIDDEN):
    B = lane_veh.shape[0]
    wp = dims['waypoints']
    veh_d = dims['companion_vehicle'] * 2
    lane = lane_veh[:, :wp]
    veh = lane_veh[:, wp:wp + veh_d]
    light = lane_veh[:, wp + veh_d:]

    lin = lambda x, n: x @ params[n + '_w'].T + params[n + '_b']
    relu = lambda x: jnp.maximum(x, 0.0)
    lrelu = lambda x: jnp.where(x >= 0, x, NEG_SLOPE * x)

    ego_enc = lin(relu(lin(ego_info, 'ego_encoder')), 'w')
    lane_enc = lin(relu(lin(lane, 'lane_encoder')), 'w')
    veh_enc = lin(relu(lin(veh, 'veh_encoder')), 'w')
    light_enc = lin(relu(lin(light, 'light_encoder')), 'w')

    state_enc = jnp.concatenate([lane_enc, veh_enc, light_enc], 1).reshape(B, 3, hidden)
    a = lin(ego_enc, 'ego_a')
    score = jnp.concatenate([lrelu(a + lin(lane_enc, 'ego_o')),
                             lrelu(a + lin(veh_enc, 'ego_o')),
                             lrelu(a + lin(light_enc, 'ego_o'))], 1)
    p = jax.nn.softmax(score, axis=1).reshape(B, 1, 3)
    return jnp.matmul(p, state_enc).reshape(B, hidden)


if __name__ == "__main__":
    dims = {'waypoints': 10, 'companion_vehicle': 3, 'light': 3, 'ego_vehicle': 6}
    batch = 4

    key = jax.random.PRNGKey(0)
    k_lane, k_ego, k_params = jax.random.split(key, 3)

    lane_width = dims['waypoints'] + dims['companion_vehicle'] * 2 + dims['light']
    lane_veh = jax.random.normal(k_lane, (batch, lane_width), dtype=jnp.float32)
    ego_info = jax.random.normal(k_ego, (batch, dims['ego_vehicle']), dtype=jnp.float32)

    params = init_params(k_params, dims)
    ref = reference_forward(lane_veh, ego_info, params, dims)

    # f32 MXU path (tight tolerance).
    fused = fuse_params(params, dims)
    out = jax.block_until_ready(lane_wise_cross_attention_forward(lane_veh, ego_info, fused))
    assert out.shape == (batch, HIDDEN)
    assert jnp.allclose(out, ref, atol=1e-4, rtol=1e-4), "Pallas f32 kernel mismatch vs. reference"

    # bf16 MXU-operand fast path (v6e/v7x native MXU dtype; relaxed tolerance).
    fused_bf16 = fuse_params(params, dims, use_bf16=True)
    out_bf = jax.block_until_ready(
        lane_wise_cross_attention_forward(lane_veh, ego_info, fused_bf16))
    assert out_bf.shape == (batch, HIDDEN)
    assert jnp.allclose(out_bf, ref, atol=5e-2, rtol=5e-2), "Pallas bf16 kernel mismatch vs. reference"

    print("KERNEL_OK")
</pallas_src>

<mosaic_0001>
module attributes {stable_mosaic.version = 11 : i64} {
  func.func @lane_wise_cross_attention_kernel(%arg0: i32, %arg1: memref<8x32xf32, #tpu.memory_space<vmem>>, %arg2: memref<32x256xf32, #tpu.memory_space<vmem>>, %arg3: memref<1x256xf32, #tpu.memory_space<vmem>>, %arg4: memref<256x256xf32, #tpu.memory_space<vmem>>, %arg5: memref<1x256xf32, #tpu.memory_space<vmem>>, %arg6: memref<8x128xf32, #tpu.memory_space<vmem>>) attributes {dimension_semantics = [#tpu.dimension_semantics<parallel>], iteration_bounds = array<i64: 1>, scalar_prefetch = 0 : i64, scratch_operands = 0 : i64, tpu.core_type = #tpu.core_type<tc>, window_params = [{transform_indices = @transform_0, window_bounds = array<i64: 8, 32>}, {pipeline_mode = #tpu.pipeline_mode<synchronous>, transform_indices = @transform_1, window_bounds = array<i64: 32, 256>}, {pipeline_mode = #tpu.pipeline_mode<synchronous>, transform_indices = @transform_2, window_bounds = array<i64: 1, 256>}, {pipeline_mode = #tpu.pipeline_mode<synchronous>, transform_indices = @transform_3, window_bounds = array<i64: 256, 256>}, {pipeline_mode = #tpu.pipeline_mode<synchronous>, transform_indices = @transform_4, window_bounds = array<i64: 1, 256>}, {transform_indices = @transform_5, window_bounds = array<i64: 8, 128>}]} {
    %c0 = arith.constant 0 : index
    %c0_0 = arith.constant 0 : index
    %0 = vector.load %arg1[%c0, %c0_0] : memref<8x32xf32, #tpu.memory_space<vmem>>, vector<8x32xf32>
    %c0_1 = arith.constant 0 : index
    %c0_2 = arith.constant 0 : index
    %1 = vector.load %arg2[%c0_1, %c0_2] : memref<32x256xf32, #tpu.memory_space<vmem>>, vector<32x256xf32>
    %cst = arith.constant dense<0.000000e+00> : vector<8x256xf32>
    %2 = tpu.matmul %0, %1, %cst {dimension_numbers = #tpu.dot_dimension_numbers<[1], [0], [0], [1], [0, 0, 1, 1], [], []>} : vector<8x32xf32>, vector<32x256xf32>, vector<8x256xf32> -> vector<8x256xf32>
    %c0_3 = arith.constant 0 : index
    %c0_4 = arith.constant 0 : index
    %3 = vector.load %arg3[%c0_3, %c0_4] : memref<1x256xf32, #tpu.memory_space<vmem>>, vector<1x256xf32>
    %4 = vector.broadcast %3 : vector<1x256xf32> to vector<8x256xf32>
    %5 = arith.addf %2, %4 : vector<8x256xf32>
    %cst_5 = arith.constant 0.000000e+00 : f32
    %6 = vector.broadcast %cst_5 : f32 to vector<8x256xf32>
    %7 = arith.maximumf %5, %6 : vector<8x256xf32>
    %c0_6 = arith.constant 0 : index
    %c0_7 = arith.constant 0 : index
    %8 = vector.load %arg4[%c0_6, %c0_7] : memref<256x256xf32, #tpu.memory_space<vmem>>, vector<256x256xf32>
    %cst_8 = arith.constant dense<0.000000e+00> : vector<8x256xf32>
    %9 = tpu.matmul %7, %8, %cst_8 {dimension_numbers = #tpu.dot_dimension_numbers<[1], [0], [0], [1], [0, 0, 1, 1], [], []>} : vector<8x256xf32>, vector<256x256xf32>, vector<8x256xf32> -> vector<8x256xf32>
    %c0_9 = arith.constant 0 : index
    %c0_10 = arith.constant 0 : index
    %10 = vector.load %arg5[%c0_9, %c0_10] : memref<1x256xf32, #tpu.memory_space<vmem>>, vector<1x256xf32>
    %11 = vector.broadcast %10 : vector<1x256xf32> to vector<8x256xf32>
    %12 = arith.addf %9, %11 : vector<8x256xf32>
    %13 = vector.extract_strided_slice %12 {offsets = [0, 192], sizes = [8, 3], strides = [1, 1]} : vector<8x256xf32> to vector<8x3xf32>
    %cst_11 = arith.constant 0.000000e+00 : f32
    %14 = vector.broadcast %cst_11 : f32 to vector<8x3xf32>
    %15 = arith.cmpf oge, %13, %14 : vector<8x3xf32>
    %cst_12 = arith.constant 1.000000e-01 : f32
    %16 = vector.broadcast %cst_12 : f32 to vector<8x3xf32>
    %17 = arith.mulf %16, %13 : vector<8x3xf32>
    %18 = arith.select %15, %13, %17 : vector<8x3xi1>, vector<8x3xf32>
    %cst_13 = arith.constant dense<0xFF800000> : vector<8xf32>
    %19 = vector.multi_reduction <maximumf>, %18, %cst_13 [1] : vector<8x3xf32> to vector<8xf32>
    %20 = vector.shape_cast %19 : vector<8xf32> to vector<8x1xf32>
    %21 = vector.broadcast %20 : vector<8x1xf32> to vector<8x3xf32>
    %22 = arith.subf %18, %21 : vector<8x3xf32>
    %23 = math.exp %22 : vector<8x3xf32>
    %cst_14 = arith.constant dense<0.000000e+00> : vector<8xf32>
    %24 = vector.multi_reduction <add>, %23, %cst_14 [1] : vector<8x3xf32> to vector<8xf32>
    %25 = vector.shape_cast %24 : vector<8xf32> to vector<8x1xf32>
    %26 = vector.broadcast %25 : vector<8x1xf32> to vector<8x3xf32>
    %27 = arith.divf %23, %26 : vector<8x3xf32>
    %28 = vector.extract_strided_slice %27 {offsets = [0, 0], sizes = [8, 1], strides = [1, 1]} : vector<8x3xf32> to vector<8x1xf32>
    %29 = vector.extract_strided_slice %12 {offsets = [0, 0], sizes = [8, 64], strides = [1, 1]} : vector<8x256xf32> to vector<8x64xf32>
    %30 = vector.broadcast %28 : vector<8x1xf32> to vector<8x64xf32>
    %31 = arith.mulf %30, %29 : vector<8x64xf32>
    %32 = vector.extract_strided_slice %27 {offsets = [0, 1], sizes = [8, 1], strides = [1, 1]} : vector<8x3xf32> to vector<8x1xf32>
    %33 = vector.extract_strided_slice %12 {offsets = [0, 64], sizes = [8, 64], strides = [1, 1]} : vector<8x256xf32> to vector<8x64xf32>
    %34 = vector.broadcast %32 : vector<8x1xf32> to vector<8x64xf32>
    %35 = arith.mulf %34, %33 : vector<8x64xf32>
    %36 = arith.addf %31, %35 : vector<8x64xf32>
    %37 = vector.extract_strided_slice %27 {offsets = [0, 2], sizes = [8, 1], strides = [1, 1]} : vector<8x3xf32> to vector<8x1xf32>
    %38 = vector.extract_strided_slice %12 {offsets = [0, 128], sizes = [8, 64], strides = [1, 1]} : vector<8x256xf32> to vector<8x64xf32>
    %39 = vector.broadcast %37 : vector<8x1xf32> to vector<8x64xf32>
    %40 = arith.mulf %39, %38 : vector<8x64xf32>
    %41 = arith.addf %36, %40 : vector<8x64xf32>
    %cst_15 = arith.constant 0.000000e+00 : f32
    %42 = vector.broadcast %cst_15 : f32 to vector<8x64xf32>
    %43 = tpu.concatenate %41, %42 in 1 : vector<8x64xf32>, vector<8x64xf32> -> vector<8x128xf32>
    %c0_16 = arith.constant 0 : index
    %c0_17 = arith.constant 0 : index
    %44 = vector.load %arg6[%c0_16, %c0_17] : memref<8x128xf32, #tpu.memory_space<vmem>>, vector<8x128xf32>
    tpu.vector_store %arg6[%c0_16, %c0_17], %43 {strides = array<i32>} : memref<8x128xf32, #tpu.memory_space<vmem>>, vector<8x128xf32>,
    return
  }
  func.func @transform_0(%arg0: i32) -> (i32, i32) {
    %c0_i32 = arith.constant 0 : i32
    %c0_i32_0 = arith.constant 0 : i32
    return %arg0, %c0_i32 : i32, i32
  }
  func.func @transform_1(%arg0: i32) -> (i32, i32) {
    %c0_i32 = arith.constant 0 : i32
    %c0_i32_0 = arith.constant 0 : i32
    %c0_i32_1 = arith.constant 0 : i32
    return %c0_i32, %c0_i32_0 : i32, i32
  }
  func.func @transform_2(%arg0: i32) -> (i32, i32) {
    %c0_i32 = arith.constant 0 : i32
    %c0_i32_0 = arith.constant 0 : i32
    %c0_i32_1 = arith.constant 0 : i32
    return %c0_i32, %c0_i32_0 : i32, i32
  }
  func.func @transform_3(%arg0: i32) -> (i32, i32) {
    %c0_i32 = arith.constant 0 : i32
    %c0_i32_0 = arith.constant 0 : i32
    %c0_i32_1 = arith.constant 0 : i32
    return %c0_i32, %c0_i32_0 : i32, i32
  }
  func.func @transform_4(%arg0: i32) -> (i32, i32) {
    %c0_i32 = arith.constant 0 : i32
    %c0_i32_0 = arith.constant 0 : i32
    %c0_i32_1 = arith.constant 0 : i32
    return %c0_i32, %c0_i32_0 : i32, i32
  }
  func.func @transform_5(%arg0: i32) -> (i32, i32) {
    %c0_i32 = arith.constant 0 : i32
    %c0_i32_0 = arith.constant 0 : i32
    return %arg0, %c0_i32 : i32, i32
  }
}

</mosaic_0001>

<llo_original>
// kernel: tpu_custom_call.1
$region0: #{tpu_custom_call.1}
  #allocation0 [shape = 'u32[]', space=smem, size = 0x4, offset = 0x4, fixed_abs, tag = 'smem constant byte address 0x4 - core index']
  #allocation1 [shape = 'u32[72,128]{1,0:T(1,128)}', space=vmem, size = 0x9000, scoped, tag = 'internal scratch']
  %s0 = inlined_call_operand.hbm [shape: f32[8,32], index: 0, kind: input, shape index: {}]
  %s1 = inlined_call_operand.hbm [shape: f32[32,256], index: 1, kind: input, shape index: {}]
  %s2 = inlined_call_operand.hbm [shape: f32[1,256], index: 2, kind: input, shape index: {}]
  %s3 = inlined_call_operand.hbm [shape: f32[256,256], index: 3, kind: input, shape index: {}]
  %s4 = inlined_call_operand.vmem [shape: f32[1,256], index: 4, kind: input, shape index: {}]
  %s5 = inlined_call_operand.hbm [shape: f32[8,128], index: 5, kind: output, shape index: {}]
  %s6 = sld [smem:[#allocation0]]
  $region46: #{tpu_custom_call.1} parent=0
    _
  %s8 = ssub.s32 1, %s6
  %s9 = scalar_select 0, %s8, %s6
  $region1: #{tpu_custom_call.1} parent=0
    #allocation2 [shape = 'u8[4096]{0}', space=vmem, size = 0x1000, scoped, tag = 'input window, operand 0, single buffered']
    #allocation3 [shape = 's32[1]{0}', space=sflag, size = 0x4, scoped, tag = 'scoped memory for tpu_custom_call.1']
    #allocation4 [shape = 's32[1]{0}', space=sflag, size = 0x4, scoped, tag = 'scoped memory for tpu_custom_call.1']
    #allocation5 [shape = 'u8[32768]{0}', space=vmem, size = 0x8000, scoped, tag = 'input window, operand 1, single buffered']
    #allocation6 [shape = 's32[1]{0}', space=sflag, size = 0x4, scoped, tag = 'scoped memory for tpu_custom_call.1']
    #allocation7 [shape = 'u8[1024]{0}', space=vmem, size = 0x400, scoped, tag = 'input window, operand 2, single buffered']
    #allocation8 [shape = 'u8[262144]{0}', space=vmem, size = 0x40000, scoped, tag = 'input window, operand 3, single buffered']
    #allocation9 [shape = 's32[1]{0}', space=sflag, size = 0x4, scoped, tag = 'scoped memory for tpu_custom_call.1']
    #allocation10 [shape = 'u8[4096]{0}', space=vmem, size = 0x1000, scoped, tag = 'output window, operand 0, single buffered']
    %10 = vsyncpa [#allocation3], 0
    %11 = vsyncpa [#allocation6], 0
    %12 = vsyncpa [#allocation9], 0
    %13 = vsyncpa [#allocation4], 0
    // Predicated region
    $region2: #{tpu_custom_call.1} parent=1 // pred_check
      _
    $region3: #{tpu_custom_call.1} parent=1 // pred_check_branch
      %15 = sbr.rel (0) target = $region5
    $region4: #{tpu_custom_call.1} parent=1 // pred_region
      %17 = vsyncadd [#allocation3], 0
      %s19 = sshll.u32 %s0, 4
      %s20 = int_to_ptr.hbm [resolvable:$true] %s19
      %s21 = sshll.u32 [#allocation2], 4
      %s22 = int_to_ptr.vmem [resolvable:$true] %s21
      %24 = dma.hbm_to_vmem [thread:$0]  %s20, 128, %s22, [#allocation3]
    $region5: #{tpu_custom_call.1} parent=1 // pred_fallthru
      _
    // Predicated region
    $region6: #{tpu_custom_call.1} parent=1 // pred_check
      _
    $region7: #{tpu_custom_call.1} parent=1 // pred_check_branch
      %26 = sbr.rel (0) target = $region9
    $region8: #{tpu_custom_call.1} parent=1 // pred_region
      %28 = vsyncadd [#allocation6], 0
      %s29 = sshll.u32 %s1, 4
      %s30 = int_to_ptr.hbm [resolvable:$true] %s29
      %s31 = sshll.u32 [#allocation5], 4
      %s32 = int_to_ptr.vmem [resolvable:$true] %s31
      %37 = dma.hbm_to_vmem [thread:$0]  %s30, 1024, %s32, [#allocation6], 256, 256, 16
    $region9: #{tpu_custom_call.1} parent=1 // pred_fallthru
      _
    // Predicated region
    $region10: #{tpu_custom_call.1} parent=1 // pred_check
      _
    $region11: #{tpu_custom_call.1} parent=1 // pred_check_branch
      %39 = sbr.rel (0) target = $region13
    $region12: #{tpu_custom_call.1} parent=1 // pred_region
      %41 = vsyncadd [#allocation6], 0
      %s43 = sshll.u32 %s2, 4
      %s44 = int_to_ptr.hbm [resolvable:$true] %s43
      %s45 = sshll.u32 [#allocation7], 4
      %s46 = int_to_ptr.vmem [resolvable:$true] %s45
      %48 = dma.hbm_to_vmem [thread:$0]  %s44, 32, %s46, [#allocation6]
    $region13: #{tpu_custom_call.1} parent=1 // pred_fallthru
      _
    // Predicated region
    $region14: #{tpu_custom_call.1} parent=1 // pred_check
      _
    $region15: #{tpu_custom_call.1} parent=1 // pred_check_branch
      %50 = sbr.rel (0) target = $region17
    $region16: #{tpu_custom_call.1} parent=1 // pred_region
      %52 = vsyncadd [#allocation9], 0
      %s53 = sshll.u32 %s3, 4
      %s54 = int_to_ptr.hbm [resolvable:$true] %s53
      %s55 = sshll.u32 [#allocation8], 4
      %s56 = int_to_ptr.vmem [resolvable:$true] %s55
      %61 = dma.hbm_to_vmem [thread:$0]  %s54, 8192, %s56, [#allocation9], 256, 256, 16
    $region17: #{tpu_custom_call.1} parent=1 // pred_fallthru
      _
    // Predicated region
    $region18: #{tpu_custom_call.1} parent=1 // pred_check
      _
    $region19: #{tpu_custom_call.1} parent=1 // pred_check_branch
      %63 = sbr.rel (0) target = $region21
    $region20: #{tpu_custom_call.1} parent=1 // pred_region
      _
    $region21: #{tpu_custom_call.1} parent=1 // pred_fallthru
      _
    // Predicated region
    $region22: #{tpu_custom_call.1} parent=1 // pred_check
      _
    $region23: #{tpu_custom_call.1} parent=1 // pred_check_branch
      %65 = sbr.rel (0) target = $region25
    $region24: #{tpu_custom_call.1} parent=1 // pred_region
      %67 = dma.done [#allocation3], 128
    $region25: #{tpu_custom_call.1} parent=1 // pred_fallthru
      _
    // Predicated region
    $region26: #{tpu_custom_call.1} parent=1 // pred_check
      _
    $region27: #{tpu_custom_call.1} parent=1 // pred_check_branch
      %69 = sbr.rel (0) target = $region29
    $region28: #{tpu_custom_call.1} parent=1 // pred_region
      %71 = dma.done [#allocation6], 1024
    $region29: #{tpu_custom_call.1} parent=1 // pred_fallthru
      _
    // Predicated region
    $region30: #{tpu_custom_call.1} parent=1 // pred_check
      _
    $region31: #{tpu_custom_call.1} parent=1 // pred_check_branch
      %73 = sbr.rel (0) target = $region33
    $region32: #{tpu_custom_call.1} parent=1 // pred_region
      %75 = dma.done [#allocation6], 32
    $region33: #{tpu_custom_call.1} parent=1 // pred_fallthru
      _
    // Predicated region
    $region34: #{tpu_custom_call.1} parent=1 // pred_check
      _
    $region35: #{tpu_custom_call.1} parent=1 // pred_check_branch
      %77 = sbr.rel (0) target = $region37
    $region36: #{tpu_custom_call.1} parent=1 // pred_region
      %79 = dma.done [#allocation9], 8192
    $region37: #{tpu_custom_call.1} parent=1 // pred_fallthru
      _
    %v80 = vld [vmem:[#allocation2] sm:$0xff]
    %v81 = vld [vmem:[#allocation5] sm:$0xff]
    %v82 = vld [vmem:[#allocation5 + $0x8] sm:$0xff]
    %v83 = vld [vmem:[#allocation5 + $0x10] sm:$0xff]
    %v84 = vld [vmem:[#allocation5 + $0x18] sm:$0xff]
    %v85 = vld [vmem:[#allocation5 + $0x20] sm:$0xff]
    %v86 = vld [vmem:[#allocation5 + $0x28] sm:$0xff]
    %v87 = vld [vmem:[#allocation5 + $0x30] sm:$0xff]
    %v88 = vld [vmem:[#allocation5 + $0x38] sm:$0xff]
    %v89 = vld [vmem:[#allocation7] sm:$0x3]
    %v91 = vperm.slane %v89, 0
    %v92 = vperm.slane %v89, 1
    %vm95 = vcmask 261120
    %v97 = vsel %vm95, %v80, 0
    %99 = vmatpush.msra.mxu0 0.0
    %100 = vmatpush.msra.mxu0 0.0
    %101 = vmatpush.msra.mxu0 0.0
    %102 = vmatpush.msra.mxu0 0.0
    %103 = vmatpush.msra.mxu0 0.0
    %104 = vmatpush.msra.mxu0 0.0
    %105 = vmatpush.msra.mxu0 0.0
    %106 = vmatpush.msra.mxu0 0.0
    %107 = vmatpush.msra.mxu0 0.0
    %108 = vmatpush.msra.mxu0 0.0
    %109 = vmatpush.msra.mxu0 0.0
    %110 = vmatpush.msra.mxu0 0.0
    %111 = vmatpush.msra.mxu0 %v87
    %112 = vmatpush.msra.mxu0 %v85
    %113 = vmatpush.msra.mxu0 %v83
    %114 = vmatpush.msra.mxu0 %v81
    %115 = vmatmul.f32.gmra.mxu0 %v97
    %v116 = vpop.f32.mrf.mxu0
    %v117 = vadd.f32 %v91, %v116
    %118 = vdwg.mxu0
    %119 = vmatpush.msra.mxu0 0.0
    %120 = vmatpush.msra.mxu0 0.0
    %121 = vmatpush.msra.mxu0 0.0
    %122 = vmatpush.msra.mxu0 0.0
    %123 = vmatpush.msra.mxu0 0.0
    %124 = vmatpush.msra.mxu0 0.0
    %125 = vmatpush.msra.mxu0 0.0
    %126 = vmatpush.msra.mxu0 0.0
    %127 = vmatpush.msra.mxu0 0.0
    %128 = vmatpush.msra.mxu0 0.0
    %129 = vmatpush.msra.mxu0 0.0
    %130 = vmatpush.msra.mxu0 0.0
    %131 = vmatpush.msra.mxu0 %v88
    %132 = vmatpush.msra.mxu0 %v86
    %133 = vmatpush.msra.mxu0 %v84
    %134 = vmatpush.msra.mxu0 %v82
    %135 = vmatmul.f32.gmra.mxu0 %v97
    %v136 = vpop.f32.mrf.mxu0
    %v137 = vadd.f32 %v92, %v136
    %138 = vdwg.mxu0
    %v139 = vmax.f32 %v117, 0.0
    %v140 = vmax.f32 %v137, 0.0
    %v141 = vld [vmem:[#allocation8] sm:$0xff]
    %v142 = vld [vmem:[#allocation8 + $0x8] sm:$0xff]
    %v143 = vld [vmem:[#allocation8 + $0x10] sm:$0xff]
    %v144 = vld [vmem:[#allocation8 + $0x18] sm:$0xff]
    %v145 = vld [vmem:[#allocation8 + $0x20] sm:$0xff]
    %v146 = vld [vmem:[#allocation8 + $0x28] sm:$0xff]
    %v147 = vld [vmem:[#allocation8 + $0x30] sm:$0xff]
    %v148 = vld [vmem:[#allocation8 + $0x38] sm:$0xff]
    %v149 = vld [vmem:[#allocation8 + $0x40] sm:$0xff]
    %v150 = vld [vmem:[#allocation8 + $0x48] sm:$0xff]
    %v151 = vld [vmem:[#allocation8 + $0x50] sm:$0xff]
    %v152 = vld [vmem:[#allocation8 + $0x58] sm:$0xff]
    %v153 = vld [vmem:[#allocation8 + $0x60] sm:$0xff]
    %v154 = vld [vmem:[#allocation8 + $0x68] sm:$0xff]
    %v155 = vld [vmem:[#allocation8 + $0x70] sm:$0xff]
    %v156 = vld [vmem:[#allocation8 + $0x78] sm:$0xff]
    %v157 = vld [vmem:[#allocation8 + $0x80] sm:$0xff]
    %v158 = vld [vmem:[#allocation8 + $0x88] sm:$0xff]
    %v159 = vld [vmem:[#allocation8 + $0x90] sm:$0xff]
    %v160 = vld [vmem:[#allocation8 + $0x98] sm:$0xff]
    %v161 = vld [vmem:[#allocation8 + $0xa0] sm:$0xff]
    %v162 = vld [vmem:[#allocation8 + $0xa8] sm:$0xff]
    %v163 = vld [vmem:[#allocation8 + $0xb0] sm:$0xff]
    %v164 = vld [vmem:[#allocation8 + $0xb8] sm:$0xff]
    %v165 = vld [vmem:[#allocation8 + $0xc0] sm:$0xff]
    %v166 = vld [vmem:[#allocation8 + $0xc8] sm:$0xff]
    %v167 = vld [vmem:[#allocation8 + $0xd0] sm:$0xff]
    %v168 = vld [vmem:[#allocation8 + $0xd8] sm:$0xff]
    %v169 = vld [vmem:[#allocation8 + $0xe0] sm:$0xff]
    %v170 = vld [vmem:[#allocation8 + $0xe8] sm:$0xff]
    %v171 = vld [vmem:[#allocation8 + $0xf0] sm:$0xff]
    %v172 = vld [vmem:[#allocation8 + $0xf8] sm:$0xff]
    %v173 = vld [vmem:[#allocation8 + $0x100] sm:$0xff]
    %v174 = vld [vmem:[#allocation8 + $0x108] sm:$0xff]
    %v175 = vld [vmem:[#allocation8 + $0x110] sm:$0xff]
    %v176 = vld [vmem:[#allocation8 + $0x118] sm:$0xff]
    %v177 = vld [vmem:[#allocation8 + $0x120] sm:$0xff]
    %v178 = vld [vmem:[#allocation8 + $0x128] sm:$0xff]
    %v179 = vld [vmem:[#allocation8 + $0x130] sm:$0xff]
    %v180 = vld [vmem:[#allocation8 + $0x138] sm:$0xff]
    %v181 = vld [vmem:[#allocation8 + $0x140] sm:$0xff]
    %v182 = vld [vmem:[#allocation8 + $0x148] sm:$0xff]
    %v183 = vld [vmem:[#allocation8 + $0x150] sm:$0xff]
    %v184 = vld [vmem:[#allocation8 + $0x158] sm:$0xff]
    %v185 = vld [vmem:[#allocation8 + $0x160] sm:$0xff]
    %v186 = vld [vmem:[#allocation8 + $0x168] sm:$0xff]
    %v187 = vld [vmem:[#allocation8 + $0x170] sm:$0xff]
    %v188 = vld [vmem:[#allocation8 + $0x178] sm:$0xff]
    %v189 = vld [vmem:[#allocation8 + $0x180] sm:$0xff]
    %v190 = vld [vmem:[#allocation8 + $0x188] sm:$0xff]
    %v191 = vld [vmem:[#allocation8 + $0x190] sm:$0xff]
    %v192 = vld [vmem:[#allocation8 + $0x198] sm:$0xff]
    %v193 = vld [vmem:[#allocation8 + $0x1a0] sm:$0xff]
    %v194 = vld [vmem:[#allocation8 + $0x1a8] sm:$0xff]
    %v195 = vld [vmem:[#allocation8 + $0x1b0] sm:$0xff]
    %v196 = vld [vmem:[#allocation8 + $0x1b8] sm:$0xff]
    %v197 = vld [vmem:[#allocation8 + $0x1c0] sm:$0xff]
    %v198 = vld [vmem:[#allocation8 + $0x1c8] sm:$0xff]
    %v199 = vld [vmem:[#allocation8 + $0x1d0] sm:$0xff]
    %v200 = vld [vmem:[#allocation8 + $0x1d8] sm:$0xff]
    %v201 = vld [vmem:[#allocation8 + $0x1e0] sm:$0xff]
    %v202 = vld [vmem:[#allocation8 + $0x1e8] sm:$0xff]
    %v203 = vld [vmem:[#allocation8 + $0x1f0] sm:$0xff]
    %v204 = vld [vmem:[#allocation8 + $0x1f8] sm:$0xff]
    %v205 = vld [vmem:[%s4] sm:$0x3]
    %v207 = vperm.slane %v205, 0
    %v208 = vperm.slane %v205, 1
    %211 = vmatpush.msra.mxu0 %v171
    %212 = vmatpush.msra.mxu0 %v169
    %213 = vmatpush.msra.mxu0 %v167
    %214 = vmatpush.msra.mxu0 %v165
    %215 = vmatpush.msra.mxu0 %v163
    %216 = vmatpush.msra.mxu0 %v161
    %217 = vmatpush.msra.mxu0 %v159
    %218 = vmatpush.msra.mxu0 %v157
    %219 = vmatpush.msra.mxu0 %v155
    %220 = vmatpush.msra.mxu0 %v153
    %221 = vmatpush.msra.mxu0 %v151
    %222 = vmatpush.msra.mxu0 %v149
    %223 = vmatpush.msra.mxu0 %v147
    %224 = vmatpush.msra.mxu0 %v145
    %225 = vmatpush.msra.mxu0 %v143
    %226 = vmatpush.msra.mxu0 %v141
    %227 = vmatmul.f32.gmra.mxu0 %v139
    %v228 = vpop.f32.mrf.mxu0
    %v229 = vadd.f32 %v207, %v228
    %230 = vdwg.mxu0
    %231 = vmatpush.msra.mxu0 %v203
    %232 = vmatpush.msra.mxu0 %v201
    %233 = vmatpush.msra.mxu0 %v199
    %234 = vmatpush.msra.mxu0 %v197
    %235 = vmatpush.msra.mxu0 %v195
    %236 = vmatpush.msra.mxu0 %v193
    %237 = vmatpush.msra.mxu0 %v191
    %238 = vmatpush.msra.mxu0 %v189
    %239 = vmatpush.msra.mxu0 %v187
    %240 = vmatpush.msra.mxu0 %v185
    %241 = vmatpush.msra.mxu0 %v183
    %242 = vmatpush.msra.mxu0 %v181
    %243 = vmatpush.msra.mxu0 %v179
    %244 = vmatpush.msra.mxu0 %v177
    %245 = vmatpush.msra.mxu0 %v175
    %246 = vmatpush.msra.mxu0 %v173
    %247 = vmatmul.f32.gmra.mxu0 %v140
    %v248 = vpop.f32.mrf.mxu0
    %v249 = vadd.f32 %v229, %v248
    %250 = vdwg.mxu0
    %251 = vmatpush.msra.mxu0 %v172
    %252 = vmatpush.msra.mxu0 %v170
    %253 = vmatpush.msra.mxu0 %v168
    %254 = vmatpush.msra.mxu0 %v166
    %255 = vmatpush.msra.mxu0 %v164
    %256 = vmatpush.msra.mxu0 %v162
    %257 = vmatpush.msra.mxu0 %v160
    %258 = vmatpush.msra.mxu0 %v158
    %259 = vmatpush.msra.mxu0 %v156
    %260 = vmatpush.msra.mxu0 %v154
    %261 = vmatpush.msra.mxu0 %v152
    %262 = vmatpush.msra.mxu0 %v150
    %263 = vmatpush.msra.mxu0 %v148
    %264 = vmatpush.msra.mxu0 %v146
    %265 = vmatpush.msra.mxu0 %v144
    %266 = vmatpush.msra.mxu0 %v142
    %267 = vmatmul.f32.gmra.mxu0 %v139
    %v268 = vpop.f32.mrf.mxu0
    %v269 = vadd.f32 %v208, %v268
    %270 = vdwg.mxu0
    %271 = vmatpush.msra.mxu0 %v204
    %272 = vmatpush.msra.mxu0 %v202
    %273 = vmatpush.msra.mxu0 %v200
    %274 = vmatpush.msra.mxu0 %v198
    %275 = vmatpush.msra.mxu0 %v196
    %276 = vmatpush.msra.mxu0 %v194
    %277 = vmatpush.msra.mxu0 %v192
    %278 = vmatpush.msra.mxu0 %v190
    %279 = vmatpush.msra.mxu0 %v188
    %280 = vmatpush.msra.mxu0 %v186
    %281 = vmatpush.msra.mxu0 %v184
    %282 = vmatpush.msra.mxu0 %v182
    %283 = vmatpush.msra.mxu0 %v180
    %284 = vmatpush.msra.mxu0 %v178
    %285 = vmatpush.msra.mxu0 %v176
    %286 = vmatpush.msra.mxu0 %v174
    %287 = vmatmul.f32.gmra.mxu0 %v140
    %v288 = vpop.f32.mrf.mxu0
    %v289 = vadd.f32 %v269, %v288
    %290 = vdwg.mxu0
    %vm291 = vcmp.ge.f32.partialorder %v289, 0.0
    %v292 = vmul.f32 %v289, 0.1
    %v293 = vsel %vm291, %v289, %v292
    %vm294 = vcmask 548352
    %v295 = vsel %vm294, %v293, -inf
    %296 = vmax.xlane.f32.xlu0 %v295
    %v297 = vpop.xlane.xlu0 %296
    %v298 = vsub.f32 %v293, %v297
    %v299 = vmul.f32 %v298, 1.442695
    %v300 = vpow.pop %v299
    %302 = vrot.lane.b32.xlu0 %v300, 64
    %v303 = vpop.permute.xlu0 %302
    %vm305 = vcmask 23552
    %v306 = vsel %vm305, %v303, 0.0
    %307 = vadd.xlane.f32.xlu0 %v306
    %v308 = vpop.xlane.xlu0 %307
    %v309 = vrcp.pop %v308
    %v310 = vmul.f32 %v308, %v309
    %v311 = vsub.f32 1.0, %v310
    %v312 = vmul.f32 %v309, %v311
    %v313 = vadd.f32 %v309, %v312
    %vm314 = vweird.f32 %v308
    %vm315 = vweird.f32 %v309
    %vm316 = vmor %vm314, %vm315
    %v317 = vsel %vm316, %v309, %v313
    %v318 = vand.u32 2147483647, %v308
    %vm319 = vcmp.eq.f32.partialorder %v318, 8.507059e+37
    %v320 = vand.u32 %v308, 2147483648
    %v321 = vor.u32 1.1754944e-38, %v320
    %v322 = vsel %vm319, %v321, %v317
    %v323 = vmul.f32 %v300, %v322
    %325 = vset.pattern.permute.xlu0 64
    %326 = vperm.xlu0 %325, %v323
    %v327 = vpop.permute.xlu0 %326
    %v329 = vmul.f32 %v327, %v249
    %330 = vset.pattern.permute.xlu0 65
    %331 = vperm.xlu0 %330, %v323
    %v332 = vpop.permute.xlu0 %331
    %v334 = vmul.f32 %v332, %v249
    %336 = vrot.lane.b32.xlu0 %v334, 64
    %v337 = vpop.permute.xlu0 %336
    %v339 = vadd.f32 %v329, %v337
    %340 = vset.pattern.permute.xlu0 66
    %341 = vperm.xlu0 %340, %v323
    %v342 = vpop.permute.xlu0 %341
    %v344 = vmul.f32 %v342, %v289
    %v345 = vadd.f32 %v339, %v344
    %vm346 = vcmask 523264
    %v347 = vsel %vm346, %v345, 0.0
    %348 = vst [vmem:[#allocation10] sm:$0xff] %v347
    // Predicated region
    $region38: #{tpu_custom_call.1} parent=1 // pred_check
      _
    $region39: #{tpu_custom_call.1} parent=1 // pred_check_branch
      %350 = sbr.rel (0) target = $region41
    $region40: #{tpu_custom_call.1} parent=1 // pred_region
      %352 = vsyncadd [#allocation4], 0
      %s354 = sshll.u32 [#allocation10], 4
      %s355 = int_to_ptr.vmem [resolvable:$true] %s354
      %s356 = sshll.u32 %s5, 4
      %s357 = int_to_ptr.hbm [resolvable:$true] %s356
      %359 = dma.vmem_to_hbm [thread:$0]  %s355, 128, %s357, [#allocation4]
    $region41: #{tpu_custom_call.1} parent=1 // pred_fallthru
      _
    // Predicated region
    $region42: #{tpu_custom_call.1} parent=1 // pred_check
      _
    $region43: #{tpu_custom_call.1} parent=1 // pred_check_branch
      %361 = sbr.rel (0) target = $region45
    $region44: #{tpu_custom_call.1} parent=1 // pred_region
      %363 = dma.done [#allocation4], 128
    $region45: #{tpu_custom_call.1} parent=1 // pred_fallthru
      _
    %364 = vsyncpa [#allocation3], 1
    %365 = vsyncpa [#allocation6], 1
    %366 = vsyncpa [#allocation9], 1
    %367 = vsyncpa [#allocation4], 1

</llo_original>
